<compile_context>
chip_gen: v6e
topology: v6e:2x2x1
jax: 0.10.0
libtpu: 0.0.40
codegen_flags: <defaults>
</compile_context>

<pallas_src>
import math

import jax
import jax.numpy as jnp
from jax.experimental import pallas as pl
from jax.experimental.pallas import tpu as pltpu


def _mlp_kernel(xT_ref, w1_ref, b1_ref, w2_ref, b2_ref, out_ref):
    # xT_ref : (2, TB)   batch tile, features on sublanes
    # w1_ref : (H, 2)    layer-1 weight (out, in)     -- resident across grid
    # b1_ref : (H, 1)    layer-1 bias as a column     -- resident across grid
    # w2_ref : (H, 1)    layer-2 weight as a column   -- resident across grid
    # b2_ref : (1, 1)    layer-2 bias scalar (SMEM)
    # out_ref: (1, TB)   lane-dense output tile
    x0 = xT_ref[0:1, :]                                   # (1, TB)
    x1 = xT_ref[1:2, :]                                   # (1, TB)

    # Layer 1 (K=2): broadcast-FMA on the VPU instead of an MXU matmul.
    h = w1_ref[:, 0:1] * x0 + w1_ref[:, 1:2] * x1 + b1_ref[...]   # (H, TB)
    h = jnp.maximum(h, 0.0)                               # ReLU

    # Layer 2 (N=1): elementwise scale + small sublane (XLU) reduction over H.
    y = jnp.sum(h * w2_ref[...], axis=0, keepdims=True)   # (1, TB)

    out_ref[...] = (y + b2_ref[0, 0]).astype(out_ref.dtype)


def single_layer_nn_forward(x, w1, b1, w2, b2, *, tb=512):
    """Forward pass of SingleLayerNNWithActivation.

    x  : (B, 2) f32
    w1 : (H, 2), b1 : (H, 1), w2 : (H, 1), b2 : (1, 1)
    tb : max batch-tile width in lanes (multiple of 128). 512 hits ~85% of
         HBM roofline on v6e; small batches automatically use a smaller tile.
    Returns (B, 1) f32.
    """
    B = x.shape[0]
    H = w1.shape[0]
    assert tb % 128 == 0

    # Adapt the tile to the batch: tiny batches pad to one 128-lane tile,
    # big batches stream tb-lane tiles through the pipeline.
    tile = min(tb, max(128, ((B + 127) // 128) * 128))
    num_tiles = pl.cdiv(B, tile)
    Bp = num_tiles * tile

    # Padded columns are zeros and are sliced away after the kernel.
    xT = jnp.pad(x.T, ((0, 0), (0, Bp - B)))              # (2, Bp)

    out = pl.pallas_call(
        _mlp_kernel,
        out_shape=jax.ShapeDtypeStruct((1, Bp), jnp.float32),
        grid=(num_tiles,),
        in_specs=[
            pl.BlockSpec((2, tile), lambda i: (0, i)),     # xT: tiled over batch
            pl.BlockSpec((H, 2), lambda i: (0, 0)),        # w1: resident
            pl.BlockSpec((H, 1), lambda i: (0, 0)),        # b1: resident
            pl.BlockSpec((H, 1), lambda i: (0, 0)),        # w2: resident
            pl.BlockSpec(memory_space=pltpu.MemorySpace.SMEM),  # b2 scalar
        ],
        out_specs=pl.BlockSpec((1, tile), lambda i: (0, i)),
        compiler_params=pltpu.CompilerParams(
            dimension_semantics=("parallel",),   # v7x megacore; no-op on v5e/v6e
        ),
    )(xT, w1, b1, w2, b2)

    return out[0, :B].reshape(B, 1)


def init_params(hidden_size, key):
    """Deterministic init mimicking torch.nn.Linear defaults:
    U(-1/sqrt(fan_in), 1/sqrt(fan_in)) for both weight and bias."""
    k1, k2, k3, k4 = jax.random.split(key, 4)

    bound1 = 1.0 / math.sqrt(2.0)          # fan_in = 2
    w1 = jax.random.uniform(k1, (hidden_size, 2), jnp.float32,
                            minval=-bound1, maxval=bound1)
    b1 = jax.random.uniform(k2, (hidden_size, 1), jnp.float32,
                            minval=-bound1, maxval=bound1)

    bound2 = 1.0 / math.sqrt(hidden_size)  # fan_in = hidden_size
    w2 = jax.random.uniform(k3, (hidden_size, 1), jnp.float32,
                            minval=-bound2, maxval=bound2)
    b2 = jax.random.uniform(k4, (1, 1), jnp.float32,
                            minval=-bound2, maxval=bound2)
    return w1, b1, w2, b2


if __name__ == "__main__":
    key = jax.random.PRNGKey(0)
    k_x, k_p = jax.random.split(key)

    batch = 8
    hidden = 32

    x = jax.random.normal(k_x, (batch, 2), jnp.float32)
    w1, b1, w2, b2 = init_params(hidden, k_p)

    y = single_layer_nn_forward(x, w1, b1, w2, b2)
    y = jax.block_until_ready(y)

    # Pure-JAX reference of torch semantics:
    #   h = relu(x @ W1.T + b1);  y = h @ W2.T + b2
    ref = jnp.maximum(x @ w1.T + b1[:, 0], 0.0) @ w2 + b2[0, 0]
    assert y.shape == (batch, 1)
    assert jnp.allclose(y, ref, atol=1e-5, rtol=1e-5)

    print("KERNEL_OK")
</pallas_src>

<mosaic_0001>
module attributes {stable_mosaic.version = 11 : i64} {
  func.func @_mlp_kernel(%arg0: i32, %arg1: memref<2x128xf32, #tpu.memory_space<vmem>>, %arg2: memref<32x2xf32, #tpu.memory_space<vmem>>, %arg3: memref<32x1xf32, #tpu.memory_space<vmem>>, %arg4: memref<32x1xf32, #tpu.memory_space<vmem>>, %arg5: memref<1x1xf32, #tpu.memory_space<smem>>, %arg6: memref<1x128xf32, #tpu.memory_space<vmem>>) attributes {dimension_semantics = [#tpu.dimension_semantics<parallel>], iteration_bounds = array<i64: 1>, scalar_prefetch = 0 : i64, scratch_operands = 0 : i64, tpu.core_type = #tpu.core_type<tc>, window_params = [{transform_indices = @transform_0, window_bounds = array<i64: 2, 128>}, {pipeline_mode = #tpu.pipeline_mode<synchronous>, transform_indices = @transform_1, window_bounds = array<i64: 32, 2>}, {pipeline_mode = #tpu.pipeline_mode<synchronous>, transform_indices = @transform_2, window_bounds = array<i64: 32, 1>}, {pipeline_mode = #tpu.pipeline_mode<synchronous>, transform_indices = @transform_3, window_bounds = array<i64: 32, 1>}, {transform_indices = @transform_4, window_bounds = array<i64: 1, 1>}, {transform_indices = @transform_5, window_bounds = array<i64: 1, 128>}]} {
    %c0 = arith.constant 0 : index
    %c0_0 = arith.constant 0 : index
    %0 = vector.load %arg1[%c0, %c0_0] : memref<2x128xf32, #tpu.memory_space<vmem>>, vector<1x128xf32>
    %c1 = arith.constant 1 : index
    %c0_1 = arith.constant 0 : index
    %1 = vector.load %arg1[%c1, %c0_1] : memref<2x128xf32, #tpu.memory_space<vmem>>, vector<1x128xf32>
    %c0_2 = arith.constant 0 : index
    %c0_3 = arith.constant 0 : index
    %2 = vector.load %arg2[%c0_2, %c0_3] : memref<32x2xf32, #tpu.memory_space<vmem>>, vector<32x1xf32>
    %3 = vector.broadcast %2 : vector<32x1xf32> to vector<32x128xf32>
    %4 = vector.broadcast %0 : vector<1x128xf32> to vector<32x128xf32>
    %5 = arith.mulf %3, %4 : vector<32x128xf32>
    %c0_4 = arith.constant 0 : index
    %c1_5 = arith.constant 1 : index
    %6 = vector.load %arg2[%c0_4, %c1_5] : memref<32x2xf32, #tpu.memory_space<vmem>>, vector<32x1xf32>
    %7 = vector.broadcast %6 : vector<32x1xf32> to vector<32x128xf32>
    %8 = vector.broadcast %1 : vector<1x128xf32> to vector<32x128xf32>
    %9 = arith.mulf %7, %8 : vector<32x128xf32>
    %10 = arith.addf %5, %9 : vector<32x128xf32>
    %c0_6 = arith.constant 0 : index
    %c0_7 = arith.constant 0 : index
    %11 = vector.load %arg3[%c0_6, %c0_7] : memref<32x1xf32, #tpu.memory_space<vmem>>, vector<32x1xf32>
    %12 = vector.broadcast %11 : vector<32x1xf32> to vector<32x128xf32>
    %13 = arith.addf %10, %12 : vector<32x128xf32>
    %cst = arith.constant 0.000000e+00 : f32
    %14 = vector.broadcast %cst : f32 to vector<32x128xf32>
    %15 = arith.maximumf %13, %14 : vector<32x128xf32>
    %c0_8 = arith.constant 0 : index
    %c0_9 = arith.constant 0 : index
    %16 = vector.load %arg4[%c0_8, %c0_9] : memref<32x1xf32, #tpu.memory_space<vmem>>, vector<32x1xf32>
    %17 = vector.broadcast %16 : vector<32x1xf32> to vector<32x128xf32>
    %18 = arith.mulf %15, %17 : vector<32x128xf32>
    %cst_10 = arith.constant dense<0.000000e+00> : vector<128xf32>
    %19 = vector.multi_reduction <add>, %18, %cst_10 [0] : vector<32x128xf32> to vector<128xf32>
    %20 = vector.shape_cast %19 : vector<128xf32> to vector<1x128xf32>
    %c0_11 = arith.constant 0 : index
    %c0_12 = arith.constant 0 : index
    %21 = memref.load %arg5[%c0_11, %c0_12] : memref<1x1xf32, #tpu.memory_space<smem>>
    %22 = vector.broadcast %21 : f32 to vector<1x128xf32>
    %23 = arith.addf %20, %22 : vector<1x128xf32>
    %c0_13 = arith.constant 0 : index
    %c0_14 = arith.constant 0 : index
    %24 = vector.load %arg6[%c0_13, %c0_14] : memref<1x128xf32, #tpu.memory_space<vmem>>, vector<1x128xf32>
    tpu.vector_store %arg6[%c0_13, %c0_14], %23 {strides = array<i32>} : memref<1x128xf32, #tpu.memory_space<vmem>>, vector<1x128xf32>,
    return
  }
  func.func @transform_0(%arg0: i32) -> (i32, i32) {
    %c0_i32 = arith.constant 0 : i32
    %c0_i32_0 = arith.constant 0 : i32
    return %c0_i32, %arg0 : i32, i32
  }
  func.func @transform_1(%arg0: i32) -> (i32, i32) {
    %c0_i32 = arith.constant 0 : i32
    %c0_i32_0 = arith.constant 0 : i32
    %c0_i32_1 = arith.constant 0 : i32
    return %c0_i32, %c0_i32_0 : i32, i32
  }
  func.func @transform_2(%arg0: i32) -> (i32, i32) {
    %c0_i32 = arith.constant 0 : i32
    %c0_i32_0 = arith.constant 0 : i32
    %c0_i32_1 = arith.constant 0 : i32
    return %c0_i32, %c0_i32_0 : i32, i32
  }
  func.func @transform_3(%arg0: i32) -> (i32, i32) {
    %c0_i32 = arith.constant 0 : i32
    %c0_i32_0 = arith.constant 0 : i32
    %c0_i32_1 = arith.constant 0 : i32
    return %c0_i32, %c0_i32_0 : i32, i32
  }
  func.func @transform_4(%arg0: i32) -> (i32, i32) {
    %c0_i32 = arith.constant 0 : i32
    %c0_i32_0 = arith.constant 0 : i32
    %c0_i32_1 = arith.constant 0 : i32
    return %c0_i32, %c0_i32_0 : i32, i32
  }
  func.func @transform_5(%arg0: i32) -> (i32, i32) {
    %c0_i32 = arith.constant 0 : i32
    %c0_i32_0 = arith.constant 0 : i32
    return %c0_i32, %arg0 : i32, i32
  }
}

</mosaic_0001>

<llo_original>
// kernel: tpu_custom_call.1
$region0: #{tpu_custom_call.1}
  #allocation0 [shape = 'u32[]', space=smem, size = 0x4, offset = 0x4, fixed_abs, tag = 'smem constant byte address 0x4 - core index']
  #allocation1 [shape = 'u32[144,128]{1,0:T(1,128)}', space=vmem, size = 0x12000, scoped, tag = 'internal scratch']
  #allocation2 [shape = 'f32[1,1]{1,0:T(1,128)S(6)}', space=smem, size = 0x200, scoped, tag = 'scoped memory for tpu_custom_call.1']
  %s0 = inlined_call_operand.vmem [shape: f32[2,128], index: 0, kind: input, shape index: {}]
  %s1 = inlined_call_operand.vmem [shape: f32[32,2], index: 1, kind: input, shape index: {}]
  %s2 = inlined_call_operand.vmem [shape: f32[32,1], index: 2, kind: input, shape index: {}]
  %s3 = inlined_call_operand.vmem [shape: f32[32,1], index: 3, kind: input, shape index: {}]
  %s4 = inlined_call_operand.<no memory space> [shape: f32[1,1], index: 4, kind: input, shape index: {}]
  %s5 = inlined_call_operand.hbm [shape: f32[1,128], index: 5, kind: output, shape index: {}]
  %s6 = sld [smem:[#allocation0]]
  $region30: #{tpu_custom_call.1} parent=0
    _
  %s8 = ssub.s32 1, %s6
  %s9 = scalar_select 0, %s8, %s6
  %10 = sst [smem:[#allocation2]] %s4
  $region1: #{tpu_custom_call.1} parent=0
    #allocation3 [shape = 'u8[512]{0}', space=vmem, size = 0x400, scoped, tag = 'output window, operand 0, single buffered']
    #allocation4 [shape = 's32[1]{0}', space=sflag, size = 0x4, scoped, tag = 'scoped memory for tpu_custom_call.1']
    %11 = vsyncpa [#allocation4], 0
    // Predicated region
    $region2: #{tpu_custom_call.1} parent=1 // pred_check
      _
    $region3: #{tpu_custom_call.1} parent=1 // pred_check_branch
      %13 = sbr.rel (0) target = $region5
    $region4: #{tpu_custom_call.1} parent=1 // pred_region
      _
    $region5: #{tpu_custom_call.1} parent=1 // pred_fallthru
      _
    // Predicated region
    $region6: #{tpu_custom_call.1} parent=1 // pred_check
      _
    $region7: #{tpu_custom_call.1} parent=1 // pred_check_branch
      %15 = sbr.rel (0) target = $region9
    $region8: #{tpu_custom_call.1} parent=1 // pred_region
      _
    $region9: #{tpu_custom_call.1} parent=1 // pred_fallthru
      _
    // Predicated region
    $region10: #{tpu_custom_call.1} parent=1 // pred_check
      _
    $region11: #{tpu_custom_call.1} parent=1 // pred_check_branch
      %17 = sbr.rel (0) target = $region13
    $region12: #{tpu_custom_call.1} parent=1 // pred_region
      _
    $region13: #{tpu_custom_call.1} parent=1 // pred_fallthru
      _
    // Predicated region
    $region14: #{tpu_custom_call.1} parent=1 // pred_check
      _
    $region15: #{tpu_custom_call.1} parent=1 // pred_check_branch
      %19 = sbr.rel (0) target = $region17
    $region16: #{tpu_custom_call.1} parent=1 // pred_region
      _
    $region17: #{tpu_custom_call.1} parent=1 // pred_fallthru
      _
    // Predicated region
    $region18: #{tpu_custom_call.1} parent=1 // pred_check
      _
    $region19: #{tpu_custom_call.1} parent=1 // pred_check_branch
      %21 = sbr.rel (0) target = $region21
    $region20: #{tpu_custom_call.1} parent=1 // pred_region
      _
    $region21: #{tpu_custom_call.1} parent=1 // pred_fallthru
      _
    %v22 = vld [vmem:[%s0] sm:$0x1]
    %v23 = vld [vmem:[%s0 + $0x1] sm:$0x1]
    %v24 = vld [vmem:[%s1] sm:$0xff]
    %v25 = vld [vmem:[%s1 + $0x8] sm:$0xff]
    %v26 = vld [vmem:[%s1 + $0x10] sm:$0xff]
    %v27 = vld [vmem:[%s1 + $0x18] sm:$0xff]
    %29 = vset.pattern.permute.xlu0 0
    %30 = vperm.xlu0 %29, %v24
    %v31 = vpop.permute.xlu0 %30
    %34 = vset.pattern.permute.xlu0 0
    %35 = vperm.xlu0 %34, %v25
    %v36 = vpop.permute.xlu0 %35
    %39 = vset.pattern.permute.xlu0 0
    %40 = vperm.xlu0 %39, %v26
    %v41 = vpop.permute.xlu0 %40
    %44 = vset.pattern.permute.xlu0 0
    %45 = vperm.xlu0 %44, %v27
    %v46 = vpop.permute.xlu0 %45
    %v48 = vlaneseq
    %v49 = vshrl.u32 %v48, 7
    %v50 = vsub.s32 0, %v49
    %v51 = vrot.slane %v22, %v50
    %v52 = vmul.f32 %v31, %v51
    %v53 = vmul.f32 %v36, %v51
    %v54 = vmul.f32 %v41, %v51
    %v55 = vmul.f32 %v46, %v51
    %56 = vset.pattern.permute.xlu0 1
    %57 = vperm.xlu0 %56, %v24
    %v58 = vpop.permute.xlu0 %57
    %60 = vset.pattern.permute.xlu0 1
    %61 = vperm.xlu0 %60, %v25
    %v62 = vpop.permute.xlu0 %61
    %64 = vset.pattern.permute.xlu0 1
    %65 = vperm.xlu0 %64, %v26
    %v66 = vpop.permute.xlu0 %65
    %68 = vset.pattern.permute.xlu0 1
    %69 = vperm.xlu0 %68, %v27
    %v70 = vpop.permute.xlu0 %69
    %v72 = vlaneseq
    %v73 = vshrl.u32 %v72, 7
    %v74 = vsub.s32 0, %v73
    %v75 = vrot.slane %v23, %v74
    %v76 = vmul.f32 %v58, %v75
    %v77 = vmul.f32 %v62, %v75
    %v78 = vmul.f32 %v66, %v75
    %v79 = vmul.f32 %v70, %v75
    %v80 = vadd.f32 %v52, %v76
    %v81 = vadd.f32 %v53, %v77
    %v82 = vadd.f32 %v54, %v78
    %v83 = vadd.f32 %v55, %v79
    %v84 = vld [vmem:[%s2] sm:$0xff]
    %v85 = vld [vmem:[%s2 + $0x8] sm:$0xff]
    %v86 = vld [vmem:[%s2 + $0x10] sm:$0xff]
    %v87 = vld [vmem:[%s2 + $0x18] sm:$0xff]
    %89 = vset.pattern.permute.xlu0 0
    %90 = vperm.xlu0 %89, %v84
    %v91 = vpop.permute.xlu0 %90
    %94 = vset.pattern.permute.xlu0 0
    %95 = vperm.xlu0 %94, %v85
    %v96 = vpop.permute.xlu0 %95
    %99 = vset.pattern.permute.xlu0 0
    %100 = vperm.xlu0 %99, %v86
    %v101 = vpop.permute.xlu0 %100
    %104 = vset.pattern.permute.xlu0 0
    %105 = vperm.xlu0 %104, %v87
    %v106 = vpop.permute.xlu0 %105
    %v108 = vadd.f32 %v80, %v91
    %v109 = vadd.f32 %v81, %v96
    %v110 = vadd.f32 %v82, %v101
    %v111 = vadd.f32 %v83, %v106
    %v112 = vmax.f32 %v108, 0.0
    %v113 = vmax.f32 %v109, 0.0
    %v114 = vmax.f32 %v110, 0.0
    %v115 = vmax.f32 %v111, 0.0
    %v116 = vld [vmem:[%s3] sm:$0xff]
    %v117 = vld [vmem:[%s3 + $0x8] sm:$0xff]
    %v118 = vld [vmem:[%s3 + $0x10] sm:$0xff]
    %v119 = vld [vmem:[%s3 + $0x18] sm:$0xff]
    %121 = vset.pattern.permute.xlu0 0
    %122 = vperm.xlu0 %121, %v116
    %v123 = vpop.permute.xlu0 %122
    %126 = vset.pattern.permute.xlu0 0
    %127 = vperm.xlu0 %126, %v117
    %v128 = vpop.permute.xlu0 %127
    %131 = vset.pattern.permute.xlu0 0
    %132 = vperm.xlu0 %131, %v118
    %v133 = vpop.permute.xlu0 %132
    %136 = vset.pattern.permute.xlu0 0
    %137 = vperm.xlu0 %136, %v119
    %v138 = vpop.permute.xlu0 %137
    %v140 = vmul.f32 %v112, %v123
    %v141 = vmul.f32 %v113, %v128
    %v142 = vmul.f32 %v114, %v133
    %v143 = vmul.f32 %v115, %v138
    %v144 = vadd.f32 %v140, %v141
    %v145 = vadd.f32 %v144, %v142
    %v146 = vadd.f32 %v145, %v143
    %v147 = vrot.slane %v146, 4
    %v148 = vadd.f32 %v146, %v147
    %v149 = vrot.slane %v148, 2
    %v150 = vadd.f32 %v148, %v149
    %v151 = vrot.slane %v150, 1
    %v152 = vadd.f32 %v150, %v151
    %s153 = sld [smem:[#allocation2]]
    %v154 = vstv %s153
    %v155 = vadd.f32 %v152, %v154
    %156 = vst [vmem:[#allocation3] sm:$0x1] %v155
    // Predicated region
    $region22: #{tpu_custom_call.1} parent=1 // pred_check
      _
    $region23: #{tpu_custom_call.1} parent=1 // pred_check_branch
      %158 = sbr.rel (0) target = $region25
    $region24: #{tpu_custom_call.1} parent=1 // pred_region
      %s160 = ssub.s32 16, 16
      %161 = vsyncadd [#allocation4], %s160
      %s163 = sshll.u32 [#allocation3], 4
      %s164 = int_to_ptr.vmem [resolvable:$true] %s163
      %166 = dma.vmem_to_hbm [thread:$0]  %s164, 16, %s5, [#allocation4]
    $region25: #{tpu_custom_call.1} parent=1 // pred_fallthru
      _
    // Predicated region
    $region26: #{tpu_custom_call.1} parent=1 // pred_check
      _
    $region27: #{tpu_custom_call.1} parent=1 // pred_check_branch
      %168 = sbr.rel (0) target = $region29
    $region28: #{tpu_custom_call.1} parent=1 // pred_region
      %169 = dma.done [#allocation4], 16
    $region29: #{tpu_custom_call.1} parent=1 // pred_fallthru
      _
    %170 = vsyncpa [#allocation4], 1

</llo_original>
